<compile_context>
chip_gen: v6e
topology: v6e:2x2x1
jax: 0.10.0
libtpu: 0.0.40
codegen_flags: <defaults>
</compile_context>

<pallas_src>
import jax
import jax.numpy as jnp
from jax import lax
from jax.experimental import pallas as pl
from jax.experimental.pallas import tpu as pltpu


def _round_up(x: int, m: int) -> int:
    return ((x + m - 1) // m) * m


def _vmem_budget_bytes() -> int:
    """Generation-aware VMEM budget (leave headroom below the physical limit)."""
    try:
        cap = int(pltpu.get_tpu_info().vmem_capacity_bytes)
    except Exception:
        cap = 64 << 20          # conservative: v7x per-TensorCore VMEM
    return max(16 << 20, cap - (24 << 20))


# ---------------------------------------------------------------------------
# Path A: one-hot MXU gather with the full (padded) table resident in VMEM.
# Only used when the table is tiny (see auto heuristic below).
# ---------------------------------------------------------------------------
def _onehot_embedding_kernel(idx_ref, w_ref, out_ref):
    # idx_ref: (TB, 1) int32 token ids for this block
    # w_ref:   (Vp, D) full (padded) embedding table, native dtype
    # out_ref: (TB, D) gathered embeddings
    ids = idx_ref[...]                                     # (TB, 1)
    w = w_ref[...]                                         # (Vp, D)
    tb, vp = ids.shape[0], w.shape[0]
    vocab_iota = lax.broadcasted_iota(jnp.int32, (tb, vp), 1)
    one_hot = (vocab_iota == ids).astype(w.dtype)          # (TB, Vp)
    acc = jnp.dot(one_hot, w, preferred_element_type=jnp.float32)   # MXU gather
    out_ref[...] = acc.astype(out_ref.dtype)


def _onehot_embedding(idx_flat, weight, *, token_block):
    t = idx_flat.shape[0]
    v, d = weight.shape
    itemsize = weight.dtype.itemsize

    # Pad the vocab dim to a multiple of 8 rows (mirrors weight_padding_size).
    # This path is gated to tiny tables, so the pad copy is negligible; the
    # large-vocab DMA path below never copies the table.
    pad_rows = (8 - v % 8) % 8
    if pad_rows:
        weight = jnp.concatenate(
            [weight, jnp.zeros((pad_rows, d), dtype=weight.dtype)], axis=0)
    vp = weight.shape[0]

    # Large token block: this path is bound by per-step pipeline overhead and
    # the (TB, Vp) one-hot build, not the MXU, on all generations (incl. v5e).
    tb = max(8, _round_up(min(token_block, _round_up(t, 8)), 8))
    n_blocks = pl.cdiv(t, tb)
    idx2d = idx_flat.reshape(t, 1)

    table_bytes = vp * d * itemsize
    # Budget: double-buffered constant-index table (the default pipeline keeps
    # two buffers even for a constant index_map), (TB,Vp) iota/compare/one-hot
    # intermediates, double-buffered output, f32 accumulator, headroom.
    vmem_need = int(2 * table_bytes
                    + tb * vp * (4 + 4 + itemsize)
                    + 2 * tb * d * itemsize
                    + tb * d * 4
                    + (8 << 20))
    vmem_limit = min(vmem_need, _vmem_budget_bytes())

    cost = pl.CostEstimate(
        flops=int(2 * n_blocks * tb * vp * d),
        transcendentals=0,
        bytes_accessed=int(table_bytes + 2 * t * d * itemsize + t * 4))

    return pl.pallas_call(
        _onehot_embedding_kernel,
        out_shape=jax.ShapeDtypeStruct((t, d), weight.dtype),
        grid_spec=pltpu.PrefetchScalarGridSpec(
            num_scalar_prefetch=0,
            grid=(n_blocks,),
            in_specs=[
                pl.BlockSpec((tb, 1), lambda i: (i, 0)),
                pl.BlockSpec((vp, d), lambda i: (0, 0)),   # constant block
            ],
            out_specs=pl.BlockSpec((tb, d), lambda i: (i, 0)),
        ),
        compiler_params=pltpu.CompilerParams(
            dimension_semantics=("parallel",),
            vmem_limit_bytes=vmem_limit),
        cost_estimate=cost,
    )(idx2d, weight)


# ---------------------------------------------------------------------------
# Path B: HBM row-gather via per-token async DMA (scales to any vocab size).
# ---------------------------------------------------------------------------
def _make_dma_gather_kernel(tb: int, n_tail: int, last_block: int):
    """Kernel specialized on static block size / tail size (fully unrolled)."""

    def _gather_rows(idx_ref, w_hbm_ref, out_ref, sem, base, n_rows):
        # 1) Read all token ids (SMEM scalar loads) and build descriptors.
        # 2) Start every row DMA back-to-back (all stay in flight).
        # 3) Drain with the SAME descriptors that were started.
        # Fully unrolled: n_rows is a Python int, so the LLO scheduler sees
        # the whole issue stream and no wait sits between SMEM reads.
        copies = []
        for r in range(n_rows):
            row = idx_ref[base + r]
            copies.append(pltpu.make_async_copy(
                w_hbm_ref.at[pl.ds(row, 1)],
                out_ref.at[pl.ds(r, 1)],
                sem.at[0]))
        for cp in copies:
            cp.start()
        for cp in copies:
            cp.wait()

    def kernel(idx_ref, w_hbm_ref, out_ref, sem):
        # idx_ref:   (T,) int32 token ids in SMEM (scalar prefetch)
        # w_hbm_ref: (V, D) embedding table left in HBM (memory_space=pl.ANY)
        # out_ref:   (TB, D) VMEM output block for this grid step
        # sem:       (1,) shared DMA semaphore
        base = pl.program_id(0) * tb
        if n_tail == tb:
            # Every block is full.
            _gather_rows(idx_ref, w_hbm_ref, out_ref, sem, base, tb)
        elif last_block == 0:
            # Single (partial) block: issue only the valid rows.
            _gather_rows(idx_ref, w_hbm_ref, out_ref, sem, base, n_tail)
        else:
            @pl.when(pl.program_id(0) < last_block)
            def _():
                _gather_rows(idx_ref, w_hbm_ref, out_ref, sem, base, tb)

            # Tail block: only the valid rows are fetched; the remaining rows
            # of the block fall outside the output array and are never
            # written back (no wasted DMA on padding).
            @pl.when(pl.program_id(0) == last_block)
            def _():
                _gather_rows(idx_ref, w_hbm_ref, out_ref, sem, base, n_tail)

    return kernel


def _dma_gather_embedding(idx_flat, weight, *, token_block):
    t = idx_flat.shape[0]
    v, d = weight.shape
    itemsize = weight.dtype.itemsize

    # Token block: large (fewer ~0.35us grid steps, more row DMAs in flight,
    # bigger writeback DMAs) but capped so the double-buffered output block
    # stays well under v7x's 64 MiB/TC VMEM.
    max_tb_vmem = max(8, (((16 << 20) // (2 * d * itemsize)) // 8) * 8)
    tb = max(8, _round_up(min(token_block, max_tb_vmem, _round_up(t, 8)), 8))
    # Keep >= 2 grid steps when possible so the "parallel" token axis can
    # split across both v7x TensorCores.
    while pl.cdiv(t, tb) < 2 and tb > 8:
        tb = max(8, _round_up(tb // 2, 8))

    n_blocks = pl.cdiv(t, tb)
    last_block = n_blocks - 1
    n_tail = t - last_block * tb          # valid rows in the last block

    kernel = _make_dma_gather_kernel(tb, n_tail, last_block)

    vmem_limit = min(int(2 * tb * d * itemsize + (8 << 20)), _vmem_budget_bytes())
    cost = pl.CostEstimate(
        flops=0,
        transcendentals=0,
        bytes_accessed=int(2 * t * d * itemsize + t * 4))

    return pl.pallas_call(
        kernel,
        out_shape=jax.ShapeDtypeStruct((t, d), weight.dtype),
        grid_spec=pltpu.PrefetchScalarGridSpec(
            num_scalar_prefetch=1,
            grid=(n_blocks,),
            in_specs=[pl.BlockSpec(memory_space=pl.ANY)],   # table stays in HBM
            out_specs=pl.BlockSpec((tb, d), lambda i, idx: (i, 0)),
            scratch_shapes=[pltpu.SemaphoreType.DMA((1,))],
        ),
        compiler_params=pltpu.CompilerParams(
            dimension_semantics=("parallel",),
            vmem_limit_bytes=vmem_limit),
        cost_estimate=cost,
    )(idx_flat, weight)


# ---------------------------------------------------------------------------
# Public wrapper (Embedding.forward, tp_size == 1)
# ---------------------------------------------------------------------------
def embedding_forward(x, weight, *, method="auto", token_block=None,
                      onehot_max_vocab=1024, onehot_max_table_bytes=2 << 20,
                      onehot_max_row_bytes=2048):
    """Embedding lookup: returns weight[x], shape x.shape + (embedding_dim,)."""
    v, d = weight.shape

    orig_shape = x.shape
    flat = x.reshape(-1).astype(jnp.int32)
    # NOTE: PyTorch nn.Embedding raises on out-of-range ids; here we clamp so
    # the HBM row DMA / one-hot stays in bounds (out-of-range ids = user error).
    flat = jnp.clip(flat, 0, v - 1)

    table_bytes = v * d * weight.dtype.itemsize
    row_bytes = d * weight.dtype.itemsize
    if method == "auto":
        # onehot only wins when both the vocabulary and the row are tiny
        # (it does ~Vp * 12B of VPU/VMEM work per token, while the DMA path
        # moves only row_bytes per token); everything else goes to HBM gather.
        method = ("onehot"
                  if (v <= onehot_max_vocab
                      and table_bytes <= onehot_max_table_bytes
                      and row_bytes <= onehot_max_row_bytes)
                  else "dma")

    if method == "onehot":
        out = _onehot_embedding(flat, weight, token_block=token_block or 512)
    elif method == "dma":
        out = _dma_gather_embedding(flat, weight,
                                    token_block=token_block or 512)
    else:
        raise ValueError(f"unknown method: {method!r}")

    return out.reshape(*orig_shape, d)


if __name__ == "__main__":
    # Small, deterministic example consistent with the module:
    # vocab (num_embeddings) = 100, hidden (embedding_dim) = 128, batch=2, seq=8.
    num_embeddings = 100
    embedding_dim = 128
    batch, seq = 2, 8

    key = jax.random.PRNGKey(0)
    k_w, k_x = jax.random.split(key)
    weight_f32 = jax.random.normal(
        k_w, (num_embeddings, embedding_dim), dtype=jnp.float32) * 0.02
    x = jax.random.randint(k_x, (batch, seq), 0, num_embeddings,
                           dtype=jnp.int32)

    # float32 table, both paths.
    ref_f32 = jnp.take(weight_f32, x, axis=0)
    for method in ("dma", "onehot"):
        out = jax.block_until_ready(
            embedding_forward(x, weight_f32, method=method))
        assert out.shape == (batch, seq, embedding_dim), out.shape
        assert jnp.allclose(out, ref_f32, atol=1e-6, rtol=1e-6), (
            f"mismatch vs reference ({method}, f32)")

    # bfloat16 table, both paths (gather must be exact in either path).
    weight_bf16 = weight_f32.astype(jnp.bfloat16)
    ref_bf16 = jnp.take(weight_bf16, x, axis=0).astype(jnp.float32)
    for method in ("dma", "onehot"):
        out = jax.block_until_ready(
            embedding_forward(x, weight_bf16, method=method))
        assert out.dtype == jnp.bfloat16, out.dtype
        assert jnp.allclose(out.astype(jnp.float32), ref_bf16,
                            atol=1e-6, rtol=1e-6), (
            f"mismatch vs reference ({method}, bf16)")

    print("KERNEL_OK")
</pallas_src>

<mosaic_0001>
module attributes {stable_mosaic.version = 11 : i64} {
  func.func @kernel(%arg0: i32, %arg1: memref<16xi32, #tpu.memory_space<smem>>, %arg2: memref<100x128xf32, #tpu.memory_space<any>>, %arg3: memref<8x128xf32, #tpu.memory_space<vmem>>, %arg4: memref<1x!tpu.dma_semaphore, #tpu.memory_space<semaphore_mem>>) attributes {dimension_semantics = [#tpu.dimension_semantics<parallel>], iteration_bounds = array<i64: 2>, scalar_prefetch = 1 : i64, scratch_operands = 1 : i64, tpu.core_type = #tpu.core_type<tc>, window_params = [{}, {transform_indices = @transform_1, window_bounds = array<i64: 8, 128>}]} {
    %c8_i32 = arith.constant 8 : i32
    %0 = arith.muli %arg0, %c8_i32 : i32
    %c0_i32 = arith.constant 0 : i32
    %1 = arith.addi %0, %c0_i32 : i32
    %2 = arith.index_cast %1 : i32 to index
    %3 = memref.load %arg1[%2] : memref<16xi32, #tpu.memory_space<smem>>
    %c1_i32 = arith.constant 1 : i32
    %4 = arith.addi %0, %c1_i32 : i32
    %5 = arith.index_cast %4 : i32 to index
    %6 = memref.load %arg1[%5] : memref<16xi32, #tpu.memory_space<smem>>
    %c2_i32 = arith.constant 2 : i32
    %7 = arith.addi %0, %c2_i32 : i32
    %8 = arith.index_cast %7 : i32 to index
    %9 = memref.load %arg1[%8] : memref<16xi32, #tpu.memory_space<smem>>
    %c3_i32 = arith.constant 3 : i32
    %10 = arith.addi %0, %c3_i32 : i32
    %11 = arith.index_cast %10 : i32 to index
    %12 = memref.load %arg1[%11] : memref<16xi32, #tpu.memory_space<smem>>
    %c4_i32 = arith.constant 4 : i32
    %13 = arith.addi %0, %c4_i32 : i32
    %14 = arith.index_cast %13 : i32 to index
    %15 = memref.load %arg1[%14] : memref<16xi32, #tpu.memory_space<smem>>
    %c5_i32 = arith.constant 5 : i32
    %16 = arith.addi %0, %c5_i32 : i32
    %17 = arith.index_cast %16 : i32 to index
    %18 = memref.load %arg1[%17] : memref<16xi32, #tpu.memory_space<smem>>
    %c6_i32 = arith.constant 6 : i32
    %19 = arith.addi %0, %c6_i32 : i32
    %20 = arith.index_cast %19 : i32 to index
    %21 = memref.load %arg1[%20] : memref<16xi32, #tpu.memory_space<smem>>
    %c7_i32 = arith.constant 7 : i32
    %22 = arith.addi %0, %c7_i32 : i32
    %23 = arith.index_cast %22 : i32 to index
    %24 = memref.load %arg1[%23] : memref<16xi32, #tpu.memory_space<smem>>
    %c0_i32_0 = arith.constant 0 : i32
    %c0_i32_1 = arith.constant 0 : i32
    %25 = tpu.memref_slice %arg2[%3, %c0_i32_1] : memref<100x128xf32, #tpu.memory_space<any>> -> memref<1x128xf32, #tpu.memory_space<any>>
    %c0_i32_2 = arith.constant 0 : i32
    %c0_i32_3 = arith.constant 0 : i32
    %26 = tpu.memref_slice %arg3[%c0_i32_2, %c0_i32_3] : memref<8x128xf32, #tpu.memory_space<vmem>> -> memref<1x128xf32, #tpu.memory_space<vmem>>
    %27 = tpu.memref_slice %arg4[%c0_i32_0] : memref<1x!tpu.dma_semaphore, #tpu.memory_space<semaphore_mem>> -> memref<1x!tpu.dma_semaphore, #tpu.memory_space<semaphore_mem>>
    %28 = tpu.memref_squeeze %27 : memref<1x!tpu.dma_semaphore, #tpu.memory_space<semaphore_mem>> -> memref<!tpu.dma_semaphore, #tpu.memory_space<semaphore_mem>>
    tpu.enqueue_dma source(%25 : memref<1x128xf32, #tpu.memory_space<any>>) target(%26 : memref<1x128xf32, #tpu.memory_space<vmem>>) target_semaphore(%28 : memref<!tpu.dma_semaphore, #tpu.memory_space<semaphore_mem>>)
    %c0_i32_4 = arith.constant 0 : i32
    %c0_i32_5 = arith.constant 0 : i32
    %29 = tpu.memref_slice %arg2[%6, %c0_i32_5] : memref<100x128xf32, #tpu.memory_space<any>> -> memref<1x128xf32, #tpu.memory_space<any>>
    %c1_i32_6 = arith.constant 1 : i32
    %c0_i32_7 = arith.constant 0 : i32
    %30 = tpu.memref_slice %arg3[%c1_i32_6, %c0_i32_7] : memref<8x128xf32, #tpu.memory_space<vmem>> -> memref<1x128xf32, #tpu.memory_space<vmem>>
    %31 = tpu.memref_slice %arg4[%c0_i32_4] : memref<1x!tpu.dma_semaphore, #tpu.memory_space<semaphore_mem>> -> memref<1x!tpu.dma_semaphore, #tpu.memory_space<semaphore_mem>>
    %32 = tpu.memref_squeeze %31 : memref<1x!tpu.dma_semaphore, #tpu.memory_space<semaphore_mem>> -> memref<!tpu.dma_semaphore, #tpu.memory_space<semaphore_mem>>
    tpu.enqueue_dma source(%29 : memref<1x128xf32, #tpu.memory_space<any>>) target(%30 : memref<1x128xf32, #tpu.memory_space<vmem>>) target_semaphore(%32 : memref<!tpu.dma_semaphore, #tpu.memory_space<semaphore_mem>>)
    %c0_i32_8 = arith.constant 0 : i32
    %c0_i32_9 = arith.constant 0 : i32
    %33 = tpu.memref_slice %arg2[%9, %c0_i32_9] : memref<100x128xf32, #tpu.memory_space<any>> -> memref<1x128xf32, #tpu.memory_space<any>>
    %c2_i32_10 = arith.constant 2 : i32
    %c0_i32_11 = arith.constant 0 : i32
    %34 = tpu.memref_slice %arg3[%c2_i32_10, %c0_i32_11] : memref<8x128xf32, #tpu.memory_space<vmem>> -> memref<1x128xf32, #tpu.memory_space<vmem>>
    %35 = tpu.memref_slice %arg4[%c0_i32_8] : memref<1x!tpu.dma_semaphore, #tpu.memory_space<semaphore_mem>> -> memref<1x!tpu.dma_semaphore, #tpu.memory_space<semaphore_mem>>
    %36 = tpu.memref_squeeze %35 : memref<1x!tpu.dma_semaphore, #tpu.memory_space<semaphore_mem>> -> memref<!tpu.dma_semaphore, #tpu.memory_space<semaphore_mem>>
    tpu.enqueue_dma source(%33 : memref<1x128xf32, #tpu.memory_space<any>>) target(%34 : memref<1x128xf32, #tpu.memory_space<vmem>>) target_semaphore(%36 : memref<!tpu.dma_semaphore, #tpu.memory_space<semaphore_mem>>)
    %c0_i32_12 = arith.constant 0 : i32
    %c0_i32_13 = arith.constant 0 : i32
    %37 = tpu.memref_slice %arg2[%12, %c0_i32_13] : memref<100x128xf32, #tpu.memory_space<any>> -> memref<1x128xf32, #tpu.memory_space<any>>
    %c3_i32_14 = arith.constant 3 : i32
    %c0_i32_15 = arith.constant 0 : i32
    %38 = tpu.memref_slice %arg3[%c3_i32_14, %c0_i32_15] : memref<8x128xf32, #tpu.memory_space<vmem>> -> memref<1x128xf32, #tpu.memory_space<vmem>>
    %39 = tpu.memref_slice %arg4[%c0_i32_12] : memref<1x!tpu.dma_semaphore, #tpu.memory_space<semaphore_mem>> -> memref<1x!tpu.dma_semaphore, #tpu.memory_space<semaphore_mem>>
    %40 = tpu.memref_squeeze %39 : memref<1x!tpu.dma_semaphore, #tpu.memory_space<semaphore_mem>> -> memref<!tpu.dma_semaphore, #tpu.memory_space<semaphore_mem>>
    tpu.enqueue_dma source(%37 : memref<1x128xf32, #tpu.memory_space<any>>) target(%38 : memref<1x128xf32, #tpu.memory_space<vmem>>) target_semaphore(%40 : memref<!tpu.dma_semaphore, #tpu.memory_space<semaphore_mem>>)
    %c0_i32_16 = arith.constant 0 : i32
    %c0_i32_17 = arith.constant 0 : i32
    %41 = tpu.memref_slice %arg2[%15, %c0_i32_17] : memref<100x128xf32, #tpu.memory_space<any>> -> memref<1x128xf32, #tpu.memory_space<any>>
    %c4_i32_18 = arith.constant 4 : i32
    %c0_i32_19 = arith.constant 0 : i32
    %42 = tpu.memref_slice %arg3[%c4_i32_18, %c0_i32_19] : memref<8x128xf32, #tpu.memory_space<vmem>> -> memref<1x128xf32, #tpu.memory_space<vmem>>
    %43 = tpu.memref_slice %arg4[%c0_i32_16] : memref<1x!tpu.dma_semaphore, #tpu.memory_space<semaphore_mem>> -> memref<1x!tpu.dma_semaphore, #tpu.memory_space<semaphore_mem>>
    %44 = tpu.memref_squeeze %43 : memref<1x!tpu.dma_semaphore, #tpu.memory_space<semaphore_mem>> -> memref<!tpu.dma_semaphore, #tpu.memory_space<semaphore_mem>>
    tpu.enqueue_dma source(%41 : memref<1x128xf32, #tpu.memory_space<any>>) target(%42 : memref<1x128xf32, #tpu.memory_space<vmem>>) target_semaphore(%44 : memref<!tpu.dma_semaphore, #tpu.memory_space<semaphore_mem>>)
    %c0_i32_20 = arith.constant 0 : i32
    %c0_i32_21 = arith.constant 0 : i32
    %45 = tpu.memref_slice %arg2[%18, %c0_i32_21] : memref<100x128xf32, #tpu.memory_space<any>> -> memref<1x128xf32, #tpu.memory_space<any>>
    %c5_i32_22 = arith.constant 5 : i32
    %c0_i32_23 = arith.constant 0 : i32
    %46 = tpu.memref_slice %arg3[%c5_i32_22, %c0_i32_23] : memref<8x128xf32, #tpu.memory_space<vmem>> -> memref<1x128xf32, #tpu.memory_space<vmem>>
    %47 = tpu.memref_slice %arg4[%c0_i32_20] : memref<1x!tpu.dma_semaphore, #tpu.memory_space<semaphore_mem>> -> memref<1x!tpu.dma_semaphore, #tpu.memory_space<semaphore_mem>>
    %48 = tpu.memref_squeeze %47 : memref<1x!tpu.dma_semaphore, #tpu.memory_space<semaphore_mem>> -> memref<!tpu.dma_semaphore, #tpu.memory_space<semaphore_mem>>
    tpu.enqueue_dma source(%45 : memref<1x128xf32, #tpu.memory_space<any>>) target(%46 : memref<1x128xf32, #tpu.memory_space<vmem>>) target_semaphore(%48 : memref<!tpu.dma_semaphore, #tpu.memory_space<semaphore_mem>>)
    %c0_i32_24 = arith.constant 0 : i32
    %c0_i32_25 = arith.constant 0 : i32
    %49 = tpu.memref_slice %arg2[%21, %c0_i32_25] : memref<100x128xf32, #tpu.memory_space<any>> -> memref<1x128xf32, #tpu.memory_space<any>>
    %c6_i32_26 = arith.constant 6 : i32
    %c0_i32_27 = arith.constant 0 : i32
    %50 = tpu.memref_slice %arg3[%c6_i32_26, %c0_i32_27] : memref<8x128xf32, #tpu.memory_space<vmem>> -> memref<1x128xf32, #tpu.memory_space<vmem>>
    %51 = tpu.memref_slice %arg4[%c0_i32_24] : memref<1x!tpu.dma_semaphore, #tpu.memory_space<semaphore_mem>> -> memref<1x!tpu.dma_semaphore, #tpu.memory_space<semaphore_mem>>
    %52 = tpu.memref_squeeze %51 : memref<1x!tpu.dma_semaphore, #tpu.memory_space<semaphore_mem>> -> memref<!tpu.dma_semaphore, #tpu.memory_space<semaphore_mem>>
    tpu.enqueue_dma source(%49 : memref<1x128xf32, #tpu.memory_space<any>>) target(%50 : memref<1x128xf32, #tpu.memory_space<vmem>>) target_semaphore(%52 : memref<!tpu.dma_semaphore, #tpu.memory_space<semaphore_mem>>)
    %c0_i32_28 = arith.constant 0 : i32
    %c0_i32_29 = arith.constant 0 : i32
    %53 = tpu.memref_slice %arg2[%24, %c0_i32_29] : memref<100x128xf32, #tpu.memory_space<any>> -> memref<1x128xf32, #tpu.memory_space<any>>
    %c7_i32_30 = arith.constant 7 : i32
    %c0_i32_31 = arith.constant 0 : i32
    %54 = tpu.memref_slice %arg3[%c7_i32_30, %c0_i32_31] : memref<8x128xf32, #tpu.memory_space<vmem>> -> memref<1x128xf32, #tpu.memory_space<vmem>>
    %55 = tpu.memref_slice %arg4[%c0_i32_28] : memref<1x!tpu.dma_semaphore, #tpu.memory_space<semaphore_mem>> -> memref<1x!tpu.dma_semaphore, #tpu.memory_space<semaphore_mem>>
    %56 = tpu.memref_squeeze %55 : memref<1x!tpu.dma_semaphore, #tpu.memory_space<semaphore_mem>> -> memref<!tpu.dma_semaphore, #tpu.memory_space<semaphore_mem>>
    tpu.enqueue_dma source(%53 : memref<1x128xf32, #tpu.memory_space<any>>) target(%54 : memref<1x128xf32, #tpu.memory_space<vmem>>) target_semaphore(%56 : memref<!tpu.dma_semaphore, #tpu.memory_space<semaphore_mem>>)
    %c0_i32_32 = arith.constant 0 : i32
    %c0_i32_33 = arith.constant 0 : i32
    %57 = tpu.memref_slice %arg2[%3, %c0_i32_33] : memref<100x128xf32, #tpu.memory_space<any>> -> memref<1x128xf32, #tpu.memory_space<any>>
    %c0_i32_34 = arith.constant 0 : i32
    %c0_i32_35 = arith.constant 0 : i32
    %58 = tpu.memref_slice %arg3[%c0_i32_34, %c0_i32_35] : memref<8x128xf32, #tpu.memory_space<vmem>> -> memref<1x128xf32, #tpu.memory_space<vmem>>
    %59 = tpu.memref_slice %arg4[%c0_i32_32] : memref<1x!tpu.dma_semaphore, #tpu.memory_space<semaphore_mem>> -> memref<1x!tpu.dma_semaphore, #tpu.memory_space<semaphore_mem>>
    %60 = tpu.memref_squeeze %59 : memref<1x!tpu.dma_semaphore, #tpu.memory_space<semaphore_mem>> -> memref<!tpu.dma_semaphore, #tpu.memory_space<semaphore_mem>>
    tpu.wait_dma2 semaphore(%60 : memref<!tpu.dma_semaphore, #tpu.memory_space<semaphore_mem>>) src(%57 : memref<1x128xf32, #tpu.memory_space<any>>) dst(%58 : memref<1x128xf32, #tpu.memory_space<vmem>>)
    %c0_i32_36 = arith.constant 0 : i32
    %c0_i32_37 = arith.constant 0 : i32
    %61 = tpu.memref_slice %arg2[%6, %c0_i32_37] : memref<100x128xf32, #tpu.memory_space<any>> -> memref<1x128xf32, #tpu.memory_space<any>>
    %c1_i32_38 = arith.constant 1 : i32
    %c0_i32_39 = arith.constant 0 : i32
    %62 = tpu.memref_slice %arg3[%c1_i32_38, %c0_i32_39] : memref<8x128xf32, #tpu.memory_space<vmem>> -> memref<1x128xf32, #tpu.memory_space<vmem>>
    %63 = tpu.memref_slice %arg4[%c0_i32_36] : memref<1x!tpu.dma_semaphore, #tpu.memory_space<semaphore_mem>> -> memref<1x!tpu.dma_semaphore, #tpu.memory_space<semaphore_mem>>
    %64 = tpu.memref_squeeze %63 : memref<1x!tpu.dma_semaphore, #tpu.memory_space<semaphore_mem>> -> memref<!tpu.dma_semaphore, #tpu.memory_space<semaphore_mem>>
    tpu.wait_dma2 semaphore(%64 : memref<!tpu.dma_semaphore, #tpu.memory_space<semaphore_mem>>) src(%61 : memref<1x128xf32, #tpu.memory_space<any>>) dst(%62 : memref<1x128xf32, #tpu.memory_space<vmem>>)
    %c0_i32_40 = arith.constant 0 : i32
    %c0_i32_41 = arith.constant 0 : i32
    %65 = tpu.memref_slice %arg2[%9, %c0_i32_41] : memref<100x128xf32, #tpu.memory_space<any>> -> memref<1x128xf32, #tpu.memory_space<any>>
    %c2_i32_42 = arith.constant 2 : i32
    %c0_i32_43 = arith.constant 0 : i32
    %66 = tpu.memref_slice %arg3[%c2_i32_42, %c0_i32_43] : memref<8x128xf32, #tpu.memory_space<vmem>> -> memref<1x128xf32, #tpu.memory_space<vmem>>
    %67 = tpu.memref_slice %arg4[%c0_i32_40] : memref<1x!tpu.dma_semaphore, #tpu.memory_space<semaphore_mem>> -> memref<1x!tpu.dma_semaphore, #tpu.memory_space<semaphore_mem>>
    %68 = tpu.memref_squeeze %67 : memref<1x!tpu.dma_semaphore, #tpu.memory_space<semaphore_mem>> -> memref<!tpu.dma_semaphore, #tpu.memory_space<semaphore_mem>>
    tpu.wait_dma2 semaphore(%68 : memref<!tpu.dma_semaphore, #tpu.memory_space<semaphore_mem>>) src(%65 : memref<1x128xf32, #tpu.memory_space<any>>) dst(%66 : memref<1x128xf32, #tpu.memory_space<vmem>>)
    %c0_i32_44 = arith.constant 0 : i32
    %c0_i32_45 = arith.constant 0 : i32
    %69 = tpu.memref_slice %arg2[%12, %c0_i32_45] : memref<100x128xf32, #tpu.memory_space<any>> -> memref<1x128xf32, #tpu.memory_space<any>>
    %c3_i32_46 = arith.constant 3 : i32
    %c0_i32_47 = arith.constant 0 : i32
    %70 = tpu.memref_slice %arg3[%c3_i32_46, %c0_i32_47] : memref<8x128xf32, #tpu.memory_space<vmem>> -> memref<1x128xf32, #tpu.memory_space<vmem>>
    %71 = tpu.memref_slice %arg4[%c0_i32_44] : memref<1x!tpu.dma_semaphore, #tpu.memory_space<semaphore_mem>> -> memref<1x!tpu.dma_semaphore, #tpu.memory_space<semaphore_mem>>
    %72 = tpu.memref_squeeze %71 : memref<1x!tpu.dma_semaphore, #tpu.memory_space<semaphore_mem>> -> memref<!tpu.dma_semaphore, #tpu.memory_space<semaphore_mem>>
    tpu.wait_dma2 semaphore(%72 : memref<!tpu.dma_semaphore, #tpu.memory_space<semaphore_mem>>) src(%69 : memref<1x128xf32, #tpu.memory_space<any>>) dst(%70 : memref<1x128xf32, #tpu.memory_space<vmem>>)
    %c0_i32_48 = arith.constant 0 : i32
    %c0_i32_49 = arith.constant 0 : i32
    %73 = tpu.memref_slice %arg2[%15, %c0_i32_49] : memref<100x128xf32, #tpu.memory_space<any>> -> memref<1x128xf32, #tpu.memory_space<any>>
    %c4_i32_50 = arith.constant 4 : i32
    %c0_i32_51 = arith.constant 0 : i32
    %74 = tpu.memref_slice %arg3[%c4_i32_50, %c0_i32_51] : memref<8x128xf32, #tpu.memory_space<vmem>> -> memref<1x128xf32, #tpu.memory_space<vmem>>
    %75 = tpu.memref_slice %arg4[%c0_i32_48] : memref<1x!tpu.dma_semaphore, #tpu.memory_space<semaphore_mem>> -> memref<1x!tpu.dma_semaphore, #tpu.memory_space<semaphore_mem>>
    %76 = tpu.memref_squeeze %75 : memref<1x!tpu.dma_semaphore, #tpu.memory_space<semaphore_mem>> -> memref<!tpu.dma_semaphore, #tpu.memory_space<semaphore_mem>>
    tpu.wait_dma2 semaphore(%76 : memref<!tpu.dma_semaphore, #tpu.memory_space<semaphore_mem>>) src(%73 : memref<1x128xf32, #tpu.memory_space<any>>) dst(%74 : memref<1x128xf32, #tpu.memory_space<vmem>>)
    %c0_i32_52 = arith.constant 0 : i32
    %c0_i32_53 = arith.constant 0 : i32
    %77 = tpu.memref_slice %arg2[%18, %c0_i32_53] : memref<100x128xf32, #tpu.memory_space<any>> -> memref<1x128xf32, #tpu.memory_space<any>>
    %c5_i32_54 = arith.constant 5 : i32
    %c0_i32_55 = arith.constant 0 : i32
    %78 = tpu.memref_slice %arg3[%c5_i32_54, %c0_i32_55] : memref<8x128xf32, #tpu.memory_space<vmem>> -> memref<1x128xf32, #tpu.memory_space<vmem>>
    %79 = tpu.memref_slice %arg4[%c0_i32_52] : memref<1x!tpu.dma_semaphore, #tpu.memory_space<semaphore_mem>> -> memref<1x!tpu.dma_semaphore, #tpu.memory_space<semaphore_mem>>
    %80 = tpu.memref_squeeze %79 : memref<1x!tpu.dma_semaphore, #tpu.memory_space<semaphore_mem>> -> memref<!tpu.dma_semaphore, #tpu.memory_space<semaphore_mem>>
    tpu.wait_dma2 semaphore(%80 : memref<!tpu.dma_semaphore, #tpu.memory_space<semaphore_mem>>) src(%77 : memref<1x128xf32, #tpu.memory_space<any>>) dst(%78 : memref<1x128xf32, #tpu.memory_space<vmem>>)
    %c0_i32_56 = arith.constant 0 : i32
    %c0_i32_57 = arith.constant 0 : i32
    %81 = tpu.memref_slice %arg2[%21, %c0_i32_57] : memref<100x128xf32, #tpu.memory_space<any>> -> memref<1x128xf32, #tpu.memory_space<any>>
    %c6_i32_58 = arith.constant 6 : i32
    %c0_i32_59 = arith.constant 0 : i32
    %82 = tpu.memref_slice %arg3[%c6_i32_58, %c0_i32_59] : memref<8x128xf32, #tpu.memory_space<vmem>> -> memref<1x128xf32, #tpu.memory_space<vmem>>
    %83 = tpu.memref_slice %arg4[%c0_i32_56] : memref<1x!tpu.dma_semaphore, #tpu.memory_space<semaphore_mem>> -> memref<1x!tpu.dma_semaphore, #tpu.memory_space<semaphore_mem>>
    %84 = tpu.memref_squeeze %83 : memref<1x!tpu.dma_semaphore, #tpu.memory_space<semaphore_mem>> -> memref<!tpu.dma_semaphore, #tpu.memory_space<semaphore_mem>>
    tpu.wait_dma2 semaphore(%84 : memref<!tpu.dma_semaphore, #tpu.memory_space<semaphore_mem>>) src(%81 : memref<1x128xf32, #tpu.memory_space<any>>) dst(%82 : memref<1x128xf32, #tpu.memory_space<vmem>>)
    %c0_i32_60 = arith.constant 0 : i32
    %c0_i32_61 = arith.constant 0 : i32
    %85 = tpu.memref_slice %arg2[%24, %c0_i32_61] : memref<100x128xf32, #tpu.memory_space<any>> -> memref<1x128xf32, #tpu.memory_space<any>>
    %c7_i32_62 = arith.constant 7 : i32
    %c0_i32_63 = arith.constant 0 : i32
    %86 = tpu.memref_slice %arg3[%c7_i32_62, %c0_i32_63] : memref<8x128xf32, #tpu.memory_space<vmem>> -> memref<1x128xf32, #tpu.memory_space<vmem>>
    %87 = tpu.memref_slice %arg4[%c0_i32_60] : memref<1x!tpu.dma_semaphore, #tpu.memory_space<semaphore_mem>> -> memref<1x!tpu.dma_semaphore, #tpu.memory_space<semaphore_mem>>
    %88 = tpu.memref_squeeze %87 : memref<1x!tpu.dma_semaphore, #tpu.memory_space<semaphore_mem>> -> memref<!tpu.dma_semaphore, #tpu.memory_space<semaphore_mem>>
    tpu.wait_dma2 semaphore(%88 : memref<!tpu.dma_semaphore, #tpu.memory_space<semaphore_mem>>) src(%85 : memref<1x128xf32, #tpu.memory_space<any>>) dst(%86 : memref<1x128xf32, #tpu.memory_space<vmem>>)
    return
  }
  func.func @transform_1(%arg0: i32, %arg1: memref<16xi32, #tpu.memory_space<smem>>) -> (i32, i32) {
    %c0_i32 = arith.constant 0 : i32
    %c0_i32_0 = arith.constant 0 : i32
    return %arg0, %c0_i32 : i32, i32
  }
}

</mosaic_0001>

<llo_original>
// kernel: tpu_custom_call.1
$region0: #{tpu_custom_call.1}
  #allocation0 [shape = 'u32[]', space=smem, size = 0x4, offset = 0x4, fixed_abs, tag = 'smem constant byte address 0x4 - core index']
  #allocation1 [shape = 'u32[144,128]{1,0:T(1,128)}', space=vmem, size = 0x12000, scoped, tag = 'internal scratch']
  #allocation2 [shape = 's32[1]{0}', space=sflag, size = 0x4, scoped, tag = 'scratch operand']
  #allocation3 [shape = 's32[1]{0}', space=sflag, size = 0x4, scoped, tag = 'scoped memory for tpu_custom_call.1']
  #allocation4 [shape = 'u8[512]{0}', space=smem, size = 0x200, scoped, tag = 'prefetched SMEM operand 0']
  #allocation7 [shape = 's32[]', space=sflag, size = 0x4, offset = 0, fixed_abs, tag = 'sflag constant byte address 0x0 - dummy sync flag']
  #allocation8 [shape = 's32[]', space=sflag, size = 0x4, offset = 0, fixed_abs, tag = 'sflag constant byte address 0x0 - dummy sync flag']
  #allocation9 [shape = 'u32[]', space=smem, size = 0x4, offset = 0x44, fixed_abs, tag = 'smem constant byte address 0x44 - assertion arg 0']
  #allocation10 [shape = 'u32[]', space=smem, size = 0x4, offset = 0x48, fixed_abs, tag = 'smem constant byte address 0x48 - assertion arg 1']
  #allocation11 [shape = 's32[]', space=sflag, size = 0x4, offset = 0, fixed_abs, tag = 'sflag constant byte address 0x0 - dummy sync flag']
  #allocation12 [shape = 's32[]', space=sflag, size = 0x4, offset = 0, fixed_abs, tag = 'sflag constant byte address 0x0 - dummy sync flag']
  #allocation13 [shape = 's32[]', space=sflag, size = 0x4, offset = 0, fixed_abs, tag = 'sflag constant byte address 0x0 - dummy sync flag']
  #allocation14 [shape = 's32[]', space=sflag, size = 0x4, offset = 0, fixed_abs, tag = 'sflag constant byte address 0x0 - dummy sync flag']
  #allocation15 [shape = 's32[]', space=sflag, size = 0x4, offset = 0, fixed_abs, tag = 'sflag constant byte address 0x0 - dummy sync flag']
  #allocation16 [shape = 's32[]', space=sflag, size = 0x4, offset = 0, fixed_abs, tag = 'sflag constant byte address 0x0 - dummy sync flag']
  #allocation17 [shape = 's32[]', space=sflag, size = 0x4, offset = 0, fixed_abs, tag = 'sflag constant byte address 0x0 - dummy sync flag']
  #allocation18 [shape = 's32[]', space=sflag, size = 0x4, offset = 0, fixed_abs, tag = 'sflag constant byte address 0x0 - dummy sync flag']
  #allocation19 [shape = 's32[]', space=sflag, size = 0x4, offset = 0, fixed_abs, tag = 'sflag constant byte address 0x0 - dummy sync flag']
  #allocation20 [shape = 's32[]', space=sflag, size = 0x4, offset = 0, fixed_abs, tag = 'sflag constant byte address 0x0 - dummy sync flag']
  #allocation21 [shape = 's32[]', space=sflag, size = 0x4, offset = 0, fixed_abs, tag = 'sflag constant byte address 0x0 - dummy sync flag']
  #allocation22 [shape = 's32[]', space=sflag, size = 0x4, offset = 0, fixed_abs, tag = 'sflag constant byte address 0x0 - dummy sync flag']
  #allocation23 [shape = 's32[]', space=sflag, size = 0x4, offset = 0, fixed_abs, tag = 'sflag constant byte address 0x0 - dummy sync flag']
  #allocation24 [shape = 's32[]', space=sflag, size = 0x4, offset = 0, fixed_abs, tag = 'sflag constant byte address 0x0 - dummy sync flag']
  %s0 = inlined_call_operand.hbm [shape: s32[16], index: 0, kind: input, shape index: {}]
  %s1 = inlined_call_operand.hbm [shape: f32[100,128], index: 1, kind: input, shape index: {}]
  %s2 = inlined_call_operand.hbm [shape: f32[16,128], index: 2, kind: output, shape index: {}]
  %s3 = sld [smem:[#allocation0]]
  $region57: #{tpu_custom_call.1} parent=0
    _
  %s5 = ssub.s32 1, %s3
  %s6 = scalar_select 0, %s5, %s3
  %8 = dma.hbm_to_smem %s0, 16, [#allocation4], [#allocation3]
  %9 = dma.done [#allocation3], 16
  %10 = sfence
  $region1: #{tpu_custom_call.1} parent=0
    #allocation5 [shape = 'u8[8192]{0}', space=vmem, size = 0x2000, scoped, tag = 'output window, operand 0']
    #allocation6 [shape = 's32[2]{0}', space=sflag, size = 0x8, scoped, tag = 'scoped memory for tpu_custom_call.1']
    %11 = vsyncpa [#allocation6], 0
    %s12 = scalar_lea.sflag [#allocation6], 1
    %13 = vsyncpa %s12, 0
    loop: start=0, step=1, limit=3
    $region2: #{tpu_custom_call.1} parent=1 // loop_pre_header
      _
    $region3: #{tpu_custom_call.1} parent=1 // loop_header
      %s15 = sphi 0, %s19
      %p16 = scmp.ge.s32.totalorder %s15, 3
      %s24 = sphi 0, %s26
      %s27 = sphi 0, %s24
      %s37 = sphi 0, %s27
    $region4: #{tpu_custom_call.1} parent=1 // loop_header_branch
      %18 = sbr.rel (%p16) target = $region8
    $region5: #{tpu_custom_call.1} parent=1 // loop_body
      %s20 = ssub.s32 %s15, 1
      %s21 = sadd.s32 %s15, 1
      %s22 = ssub.s32 %s15, %s21
      %p23 = scmp.eq.s32.totalorder %s22, 0
      %s25 = sadd.s32 %s24, 1
      %s26 = scalar_select %p23, %s24, %s25
      %p28 = pneg %p23
      %p29 = scmp.eq.s32.totalorder %s15, 1
      %p30 = por %p28, %p29
      %p31 = scmp.ne.s32.totalorder %s24, %s27
      %p32 = scmp.eq.s32.totalorder %s15, 0
      %p33 = por %p31, %p32
      %p34 = scmp.ne.s32.totalorder %s24, %s27
      %p35 = scmp.eq.s32.totalorder %s20, 1
      %p36 = por %p34, %p35
      %p38 = scmp.ne.s32.totalorder %s27, %s37
      %p39 = scmp.eq.s32.totalorder %s20, 0
      %p40 = por %p38, %p39
      %p41 = scmp.lt.s32.totalorder %s15, 2
      // Predicated region
      $region9: #{tpu_custom_call.1} parent=5 // pred_check
        %p42 = pneg %p41
      $region10: #{tpu_custom_call.1} parent=5 // pred_check_branch
        %44 = sbr.rel (%p42) target = $region12
      $region11: #{tpu_custom_call.1} parent=5 // pred_region
        %p45 = pneg %p33
        %p46 = pneg %p30
        %s47 = sand.u32 %s24, 1
        %s48 = scalar_lea.sflag [#allocation6], %s47
        %s49 = sand.u32 %s24, 1
        %s50 = smul.addr %s49, 8
        %s51 = scalar_lea.vmem [#allocation5], %s50
        %s52 = smul.u32 %s15, 8
        %s53 = sld [smem:[#allocation4 + %s52]]
        %s54 = sadd.s32 %s52, 1
        %s55 = sld [smem:[#allocation4 + %s54]]
        %s56 = sadd.s32 %s52, 2
        %s57 = sld [smem:[#allocation4 + %s56]]
        %s58 = sadd.s32 %s52, 3
        %s59 = sld [smem:[#allocation4 + %s58]]
        %s60 = sadd.s32 %s52, 4
        %s61 = sld [smem:[#allocation4 + %s60]]
        %s62 = sadd.s32 %s52, 5
        %s63 = sld [smem:[#allocation4 + %s62]]
        %s64 = sadd.s32 %s52, 6
        %s65 = sld [smem:[#allocation4 + %s64]]
        %s66 = sadd.s32 %s52, 7
        %s67 = sld [smem:[#allocation4 + %s66]]
        %s68 = smul.addr %s53, 16
        %s69 = scalar_lea.hbm %s1, %s68
        // Predicated region
        $region13: #{tpu_custom_call.1} parent=11 // pred_check
          _
        $region14: #{tpu_custom_call.1} parent=11 // pred_check_branch
          %71 = sbr.rel target = $region16
        $region15: #{tpu_custom_call.1} parent=11 // pred_region
          %72 = sst [smem:[#allocation9]] [#allocation8]
          %73 = sst [smem:[#allocation10]] [#allocation7]
        $region16: #{tpu_custom_call.1} parent=11 // pred_fallthru
          _
        %75 = shalt.err (0)
        %s77 = sshll.u32 %s51, 4
        %s78 = int_to_ptr.vmem [resolvable:$true] %s77
        %80 = dma.hbm_to_vmem [thread:$0]  %s69, 16, %s78, [#allocation2]
        %s81 = smul.addr %s55, 16
        %s82 = scalar_lea.hbm %s1, %s81
        %s83 = scalar_lea.vmem %s51, 1 [#allocation5]
        // Predicated region
        $region17: #{tpu_custom_call.1} parent=11 // pred_check
          _
        $region18: #{tpu_custom_call.1} parent=11 // pred_check_branch
          %85 = sbr.rel target = $region20
        $region19: #{tpu_custom_call.1} parent=11 // pred_region
          %86 = sst [smem:[#allocation9]] [#allocation12]
          %87 = sst [smem:[#allocation10]] [#allocation11]
        $region20: #{tpu_custom_call.1} parent=11 // pred_fallthru
          _
        %89 = shalt.err (0)
        %s91 = sshll.u32 %s83, 4
        %s92 = int_to_ptr.vmem [resolvable:$true] %s91
        %94 = dma.hbm_to_vmem [thread:$0]  %s82, 16, %s92, [#allocation2]
        %s95 = smul.addr %s57, 16
        %s96 = scalar_lea.hbm %s1, %s95
        %s97 = scalar_lea.vmem %s51, 2 [#allocation5]
        // Predicated region
        $region21: #{tpu_custom_call.1} parent=11 // pred_check
          _
        $region22: #{tpu_custom_call.1} parent=11 // pred_check_branch
          %99 = sbr.rel target = $region24
        $region23: #{tpu_custom_call.1} parent=11 // pred_region
          %100 = sst [smem:[#allocation9]] [#allocation14]
          %101 = sst [smem:[#allocation10]] [#allocation13]
        $region24: #{tpu_custom_call.1} parent=11 // pred_fallthru
          _
        %103 = shalt.err (0)
        %s105 = sshll.u32 %s97, 4
        %s106 = int_to_ptr.vmem [resolvable:$true] %s105
        %108 = dma.hbm_to_vmem [thread:$0]  %s96, 16, %s106, [#allocation2]
        %s109 = smul.addr %s59, 16
        %s110 = scalar_lea.hbm %s1, %s109
        %s111 = scalar_lea.vmem %s51, 3 [#allocation5]
        // Predicated region
        $region25: #{tpu_custom_call.1} parent=11 // pred_check
          _
        $region26: #{tpu_custom_call.1} parent=11 // pred_check_branch
          %113 = sbr.rel target = $region28
        $region27: #{tpu_custom_call.1} parent=11 // pred_region
          %114 = sst [smem:[#allocation9]] [#allocation16]
          %115 = sst [smem:[#allocation10]] [#allocation15]
        $region28: #{tpu_custom_call.1} parent=11 // pred_fallthru
          _
        %117 = shalt.err (0)
        %s119 = sshll.u32 %s111, 4
        %s120 = int_to_ptr.vmem [resolvable:$true] %s119
        %122 = dma.hbm_to_vmem [thread:$0]  %s110, 16, %s120, [#allocation2]
        %s123 = smul.addr %s61, 16
        %s124 = scalar_lea.hbm %s1, %s123
        %s125 = scalar_lea.vmem %s51, 4 [#allocation5]
        // Predicated region
        $region29: #{tpu_custom_call.1} parent=11 // pred_check
          _
        $region30: #{tpu_custom_call.1} parent=11 // pred_check_branch
          %127 = sbr.rel target = $region32
        $region31: #{tpu_custom_call.1} parent=11 // pred_region
          %128 = sst [smem:[#allocation9]] [#allocation18]
          %129 = sst [smem:[#allocation10]] [#allocation17]
        $region32: #{tpu_custom_call.1} parent=11 // pred_fallthru
          _
        %131 = shalt.err (0)
        %s133 = sshll.u32 %s125, 4
        %s134 = int_to_ptr.vmem [resolvable:$true] %s133
        %136 = dma.hbm_to_vmem [thread:$0]  %s124, 16, %s134, [#allocation2]
        %s137 = smul.addr %s63, 16
        %s138 = scalar_lea.hbm %s1, %s137
        %s139 = scalar_lea.vmem %s51, 5 [#allocation5]
        // Predicated region
        $region33: #{tpu_custom_call.1} parent=11 // pred_check
          _
        $region34: #{tpu_custom_call.1} parent=11 // pred_check_branch
          %141 = sbr.rel target = $region36
        $region35: #{tpu_custom_call.1} parent=11 // pred_region
          %142 = sst [smem:[#allocation9]] [#allocation20]
          %143 = sst [smem:[#allocation10]] [#allocation19]
        $region36: #{tpu_custom_call.1} parent=11 // pred_fallthru
          _
        %145 = shalt.err (0)
        %s147 = sshll.u32 %s139, 4
        %s148 = int_to_ptr.vmem [resolvable:$true] %s147
        %150 = dma.hbm_to_vmem [thread:$0]  %s138, 16, %s148, [#allocation2]
        %s151 = smul.addr %s65, 16
        %s152 = scalar_lea.hbm %s1, %s151
        %s153 = scalar_lea.vmem %s51, 6 [#allocation5]
        // Predicated region
        $region37: #{tpu_custom_call.1} parent=11 // pred_check
          _
        $region38: #{tpu_custom_call.1} parent=11 // pred_check_branch
          %155 = sbr.rel target = $region40
        $region39: #{tpu_custom_call.1} parent=11 // pred_region
          %156 = sst [smem:[#allocation9]] [#allocation22]
          %157 = sst [smem:[#allocation10]] [#allocation21]
        $region40: #{tpu_custom_call.1} parent=11 // pred_fallthru
          _
        %159 = shalt.err (0)
        %s161 = sshll.u32 %s153, 4
        %s162 = int_to_ptr.vmem [resolvable:$true] %s161
        %164 = dma.hbm_to_vmem [thread:$0]  %s152, 16, %s162, [#allocation2]
        %s165 = smul.addr %s67, 16
        %s166 = scalar_lea.hbm %s1, %s165
        %s167 = scalar_lea.vmem %s51, 7 [#allocation5]
        // Predicated region
        $region41: #{tpu_custom_call.1} parent=11 // pred_check
          _
        $region42: #{tpu_custom_call.1} parent=11 // pred_check_branch
          %169 = sbr.rel target = $region44
        $region43: #{tpu_custom_call.1} parent=11 // pred_region
          %170 = sst [smem:[#allocation9]] [#allocation24]
          %171 = sst [smem:[#allocation10]] [#allocation23]
        $region44: #{tpu_custom_call.1} parent=11 // pred_fallthru
          _
        %173 = shalt.err (0)
        %s175 = sshll.u32 %s167, 4
        %s176 = int_to_ptr.vmem [resolvable:$true] %s175
        %178 = dma.hbm_to_vmem [thread:$0]  %s166, 16, %s176, [#allocation2]
        %s179 = smul.u32 1, 1
        %s180 = sshll.u32 %s179, 4
        %181 = dma.done [#allocation2], %s180
        %s182 = sshll.u32 %s179, 4
        %183 = dma.done [#allocation2], %s182
        %s184 = sshll.u32 %s179, 4
        %185 = dma.done [#allocation2], %s184
        %s186 = sshll.u32 %s179, 4
        %187 = dma.done [#allocation2], %s186
        %s188 = sshll.u32 %s179, 4
        %189 = dma.done [#allocation2], %s188
        %s190 = sshll.u32 %s179, 4
        %191 = dma.done [#allocation2], %s190
        %s192 = sshll.u32 %s179, 4
        %193 = dma.done [#allocation2], %s192
        %s194 = sshll.u32 %s179, 4
        %195 = dma.done [#allocation2], %s194
        %s196 = sand.u32 %s24, 1
        %s197 = scalar_lea.sflag [#allocation6], %s196
        %s198 = sand.u32 %s24, 1
        %s199 = smul.addr %s198, 8
        %s200 = scalar_lea.vmem [#allocation5], %s199
        // Predicated region
        $region45: #{tpu_custom_call.1} parent=11 // pred_check
          %p201 = pneg %p30
        $region46: #{tpu_custom_call.1} parent=11 // pred_check_branch
          %203 = sbr.rel (%p201) target = $region48
        $region47: #{tpu_custom_call.1} parent=11 // pred_region
          %s205 = ssub.s32 128, 128
          %206 = vsyncadd %s197, %s205
          %s207 = smul.addr %s15, 128
          %s208 = scalar_lea.hbm %s2, %s207
          %s210 = sshll.u32 %s200, 4
          %s211 = int_to_ptr.vmem [resolvable:$true] %s210
          %213 = dma.vmem_to_hbm [thread:$0]  %s211, 128, %s208, %s197
        $region48: #{tpu_custom_call.1} parent=11 // pred_fallthru
          _
      $region12: #{tpu_custom_call.1} parent=5 // pred_fallthru
        _
      %p214 = scmp.le.s32.totalorder 1, %s15
      // Predicated region
      $region49: #{tpu_custom_call.1} parent=5 // pred_check
        %p215 = pneg %p214
      $region50: #{tpu_custom_call.1} parent=5 // pred_check_branch
        %217 = sbr.rel (%p215) target = $region52
      $region51: #{tpu_custom_call.1} parent=5 // pred_region
        %s218 = ssub.s32 %s15, 1
        // Predicated region
        $region53: #{tpu_custom_call.1} parent=51 // pred_check
          %p219 = pneg %p36
        $region54: #{tpu_custom_call.1} parent=51 // pred_check_branch
          %221 = sbr.rel (%p219) target = $region56
        $region55: #{tpu_custom_call.1} parent=51 // pred_region
          %s222 = sand.u32 %s27, 1
          %s223 = scalar_lea.sflag [#allocation6], %s222
          %s224 = sand.u32 %s27, 1
          %s225 = smul.addr %s224, 8
          %s226 = scalar_lea.vmem [#allocation5], %s225
          %227 = dma.done %s223, 128
        $region56: #{tpu_custom_call.1} parent=51 // pred_fallthru
          _
      $region52: #{tpu_custom_call.1} parent=5 // pred_fallthru
        _
    $region6: #{tpu_custom_call.1} parent=1 // loop_footer
      %s19 = sadd.s32 1, %s15
    $region7: #{tpu_custom_call.1} parent=1 // loop_footer_branch
      %14 = sbr.rel target = $region3
    $region8: #{tpu_custom_call.1} parent=1 // loop_exit
      _
    %228 = vsyncpa [#allocation6], 1
    %s229 = scalar_lea.sflag [#allocation6], 1
    %230 = vsyncpa %s229, 1
  %231 = vsyncmov [#allocation2]
  %s232 = vpop.sfrf %231
  %p233 = scmp.eq.s32.totalorder %s232, 0
  %p234 = pneg %p233
  %236 = shalt.err (%p234)

</llo_original>
